<compile_context>
chip_gen: v5e
topology: v5e:2x2
jax: 0.10.0
libtpu: 0.0.40
codegen_flags: <defaults>
</compile_context>

<pallas_src>
import math

import jax
import jax.numpy as jnp
from jax import lax
from jax.experimental import pallas as pl
from jax.experimental.pallas import tpu as pltpu

# --- small GPT2 config (synthetic) ---
B = 2          # batch
S = 8          # sequence length (== n_positions here, no past KV)
E = 32         # n_embd
H = 4          # n_head
D = E // H     # head_dim
I = 4 * E      # MLP intermediate size
N = B * H      # flattened (head, batch) count
LN_EPS = 1e-5
MASK_VALUE = -1e30   # large finite negative (safer than finfo.min)


def _layer_norm(x, g, b):
    # two-pass LN (robust to residual-stream growth, per review)
    mu = jnp.mean(x, axis=-1, keepdims=True)
    xc = x - mu
    var = jnp.mean(xc * xc, axis=-1, keepdims=True)
    return xc * lax.rsqrt(var + LN_EPS) * g + b


def _gelu_new(x):
    # GPT2 "gelu_new" (tanh approximation)
    return 0.5 * x * (1.0 + jnp.tanh(
        jnp.sqrt(2.0 / jnp.pi) * (x + 0.044715 * x ** 3)))


def gpt2_block_kernel(x_ref,
                      ln1_g_ref, ln1_b_ref,
                      w_attn_ref, b_attn_ref,
                      w_ap_ref, b_ap_ref,
                      ln2_g_ref, ln2_b_ref,
                      w_fc_ref, b_fc_ref,
                      w_mp_ref, b_mp_ref,
                      o_ref):
    x = x_ref[...]                                               # (B*S, E)

    # ---- ln_1 + fused QKV projection (one MXU matmul) ----
    h = _layer_norm(x, ln1_g_ref[0], ln1_b_ref[0])
    qkv = jnp.dot(h, w_attn_ref[...],
                  preferred_element_type=jnp.float32) + b_attn_ref[0]  # (B*S, 3E)

    # ---- split heads entirely in-register (no VMEM scratch, no Ref stores) ----
    # head-major order: n = hh*B + b, so the per-head all-batch rows are a
    # contiguous leading-dim slice (cheap reshape) at merge time.
    q_l, k_l, v_l = [], [], []
    for hh in range(H):
        for b in range(B):
            rows = slice(b * S, (b + 1) * S)
            q_l.append(qkv[rows, hh * D:(hh + 1) * D])
            k_l.append(qkv[rows, E + hh * D:E + (hh + 1) * D])
            v_l.append(qkv[rows, 2 * E + hh * D:2 * E + (hh + 1) * D])
    q = jnp.stack(q_l)                                           # (N, S, D)
    k = jnp.stack(k_l)
    v = jnp.stack(v_l)

    # fold 1/sqrt(D) into q (smaller tensor than the (N,S,S) scores)
    q = q * (1.0 / math.sqrt(D))

    # ---- head-batched causal attention ----
    s = jnp.einsum('nqd,nkd->nqk', q, k,
                   preferred_element_type=jnp.float32)           # (N, S, S)
    row = lax.broadcasted_iota(jnp.int32, (S, S), 0)             # built once
    col = lax.broadcasted_iota(jnp.int32, (S, S), 1)
    causal = (col <= row)[None, :, :]
    s = jnp.where(causal, s, MASK_VALUE)
    s = s - jnp.max(s, axis=-1, keepdims=True)
    p = jnp.exp(s)
    p = p * pl.reciprocal(jnp.sum(p, axis=-1, keepdims=True), approx=True)  # EUP
    a = jnp.einsum('nqk,nkd->nqd', p, v,
                   preferred_element_type=jnp.float32)           # (N, S, D)
    # TODO(synk): attn_dropout / resid_dropout are identity (inference mode).
    # TODO(synk): for real sequence lengths, switch to a flash-style online
    # softmax over KV tiles instead of materializing the (S, S) scores.

    # ---- merged-head output projection, decomposed over heads ----
    #   concat_heads(a) @ W_o == sum_h a_h @ W_o[h*D:(h+1)*D, :]
    # keeps everything in vregs: no merge scratch, no minor-dim concat.
    attn = jnp.zeros((B * S, E), jnp.float32)
    for hh in range(H):
        a_h = a[hh * B:(hh + 1) * B].reshape(B * S, D)           # leading-dim collapse
        attn = attn + jnp.dot(a_h, w_ap_ref[hh * D:(hh + 1) * D, :],
                              preferred_element_type=jnp.float32)
    x = x + attn + b_ap_ref[0]

    # ---- ln_2 + MLP ----
    # TODO(synk): at real GPT-2 dims, cast matmul operands to bf16 (f32 accum)
    # on v6e/v7x and tile the MLP over I; keep LN/softmax/GELU math in f32
    # (v5e has no bf16 VPU/EUP).
    h2 = _layer_norm(x, ln2_g_ref[0], ln2_b_ref[0])
    ff = jnp.dot(h2, w_fc_ref[...],
                 preferred_element_type=jnp.float32) + b_fc_ref[0]
    ff = _gelu_new(ff)
    ff = jnp.dot(ff, w_mp_ref[...],
                 preferred_element_type=jnp.float32) + b_mp_ref[0]
    o_ref[...] = x + ff


def _full_spec(shape):
    nd = len(shape)
    return pl.BlockSpec(shape, lambda i, _nd=nd: (0,) * _nd)


def gpt2_block(x, params):
    x2d = x.reshape(B * S, E)                      # fold (B,S) outside the kernel
    in_specs = [_full_spec(x2d.shape)] + [_full_spec(p.shape) for p in params]
    out = pl.pallas_call(
        gpt2_block_kernel,
        out_shape=jax.ShapeDtypeStruct((B * S, E), jnp.float32),
        grid_spec=pltpu.PrefetchScalarGridSpec(
            num_scalar_prefetch=0,
            grid=(1,),                             # single invocation: everything resident
            in_specs=in_specs,
            out_specs=_full_spec((B * S, E))),
        compiler_params=pltpu.CompilerParams(
            dimension_semantics=("arbitrary",)),
    )(x2d, *params)
    return out.reshape(B, S, E)


def gpt2_block_ref(x, params):
    """Pure-JAX reference mirroring the PyTorch forward (eval mode)."""
    (ln1_g, ln1_b, w_attn, b_attn, w_ap, b_ap,
     ln2_g, ln2_b, w_fc, b_fc, w_mp, b_mp) = params

    def ln(v, g, b):
        mu = jnp.mean(v, axis=-1, keepdims=True)
        var = jnp.mean((v - mu) ** 2, axis=-1, keepdims=True)
        return (v - mu) / jnp.sqrt(var + LN_EPS) * g[0] + b[0]

    residual = x
    h = ln(x, ln1_g, ln1_b)
    qkv = h @ w_attn + b_attn[0]
    q, k, v = jnp.split(qkv, 3, axis=-1)

    def split_heads(t):  # (B,S,E) -> (B,H,S,D)
        return t.reshape(B, S, H, D).transpose(0, 2, 1, 3)

    q, k, v = split_heads(q), split_heads(k), split_heads(v)
    s = jnp.einsum("bhqd,bhkd->bhqk", q, k) / math.sqrt(D)
    causal = jnp.tril(jnp.ones((S, S), dtype=bool))
    s = jnp.where(causal, s, jnp.finfo(jnp.float32).min)
    p = jax.nn.softmax(s, axis=-1)
    a = jnp.einsum("bhqk,bhkd->bhqd", p, v)
    a = a.transpose(0, 2, 1, 3).reshape(B, S, E)
    a = a @ w_ap + b_ap[0]
    x = residual + a

    residual = x
    h = ln(x, ln2_g, ln2_b)
    ff = h @ w_fc + b_fc[0]
    ff = _gelu_new(ff)
    ff = ff @ w_mp + b_mp[0]
    return residual + ff


def init_params(key):
    ks = jax.random.split(key, 4)
    # LayerNorm: gamma=1, beta=0.  Conv1D: weight ~ N(0, 0.02), bias = 0.
    ln1_g = jnp.ones((1, E), jnp.float32)
    ln1_b = jnp.zeros((1, E), jnp.float32)
    ln2_g = jnp.ones((1, E), jnp.float32)
    ln2_b = jnp.zeros((1, E), jnp.float32)
    w_attn = 0.02 * jax.random.normal(ks[0], (E, 3 * E), jnp.float32)
    b_attn = jnp.zeros((1, 3 * E), jnp.float32)
    w_ap = 0.02 * jax.random.normal(ks[1], (E, E), jnp.float32)
    b_ap = jnp.zeros((1, E), jnp.float32)
    w_fc = 0.02 * jax.random.normal(ks[2], (E, I), jnp.float32)
    b_fc = jnp.zeros((1, I), jnp.float32)
    w_mp = 0.02 * jax.random.normal(ks[3], (I, E), jnp.float32)
    b_mp = jnp.zeros((1, E), jnp.float32)
    return (ln1_g, ln1_b, w_attn, b_attn, w_ap, b_ap,
            ln2_g, ln2_b, w_fc, b_fc, w_mp, b_mp)


if __name__ == "__main__":
    key = jax.random.PRNGKey(0)
    k_x, k_p = jax.random.split(key)
    x = jax.random.normal(k_x, (B, S, E), jnp.float32)
    params = init_params(k_p)

    out = gpt2_block(x, params)
    out = jax.block_until_ready(out)

    ref = gpt2_block_ref(x, params)
    assert out.shape == (B, S, E)
    # tolerance accounts for the approx (EUP) reciprocal in the softmax denom
    assert jnp.allclose(out, ref, atol=1e-3, rtol=1e-3), (
        f"max abs diff {jnp.max(jnp.abs(out - ref))}")

    print("KERNEL_OK")
</pallas_src>

<mosaic_0001>
module attributes {stable_mosaic.version = 11 : i64} {
  func.func @gpt2_block_kernel(%arg0: i32, %arg1: memref<16x32xf32, #tpu.memory_space<vmem>>, %arg2: memref<1x32xf32, #tpu.memory_space<vmem>>, %arg3: memref<1x32xf32, #tpu.memory_space<vmem>>, %arg4: memref<32x96xf32, #tpu.memory_space<vmem>>, %arg5: memref<1x96xf32, #tpu.memory_space<vmem>>, %arg6: memref<32x32xf32, #tpu.memory_space<vmem>>, %arg7: memref<1x32xf32, #tpu.memory_space<vmem>>, %arg8: memref<1x32xf32, #tpu.memory_space<vmem>>, %arg9: memref<1x32xf32, #tpu.memory_space<vmem>>, %arg10: memref<32x128xf32, #tpu.memory_space<vmem>>, %arg11: memref<1x128xf32, #tpu.memory_space<vmem>>, %arg12: memref<128x32xf32, #tpu.memory_space<vmem>>, %arg13: memref<1x32xf32, #tpu.memory_space<vmem>>, %arg14: memref<16x32xf32, #tpu.memory_space<vmem>>) attributes {dimension_semantics = [#tpu.dimension_semantics<arbitrary>], iteration_bounds = array<i64: 1>, scalar_prefetch = 0 : i64, scratch_operands = 0 : i64, tpu.core_type = #tpu.core_type<tc>, window_params = [{pipeline_mode = #tpu.pipeline_mode<synchronous>, transform_indices = @transform_0, window_bounds = array<i64: 16, 32>}, {pipeline_mode = #tpu.pipeline_mode<synchronous>, transform_indices = @transform_1, window_bounds = array<i64: 1, 32>}, {pipeline_mode = #tpu.pipeline_mode<synchronous>, transform_indices = @transform_2, window_bounds = array<i64: 1, 32>}, {pipeline_mode = #tpu.pipeline_mode<synchronous>, transform_indices = @transform_3, window_bounds = array<i64: 32, 96>}, {pipeline_mode = #tpu.pipeline_mode<synchronous>, transform_indices = @transform_4, window_bounds = array<i64: 1, 96>}, {pipeline_mode = #tpu.pipeline_mode<synchronous>, transform_indices = @transform_5, window_bounds = array<i64: 32, 32>}, {pipeline_mode = #tpu.pipeline_mode<synchronous>, transform_indices = @transform_6, window_bounds = array<i64: 1, 32>}, {pipeline_mode = #tpu.pipeline_mode<synchronous>, transform_indices = @transform_7, window_bounds = array<i64: 1, 32>}, {pipeline_mode = #tpu.pipeline_mode<synchronous>, transform_indices = @transform_8, window_bounds = array<i64: 1, 32>}, {pipeline_mode = #tpu.pipeline_mode<synchronous>, transform_indices = @transform_9, window_bounds = array<i64: 32, 128>}, {pipeline_mode = #tpu.pipeline_mode<synchronous>, transform_indices = @transform_10, window_bounds = array<i64: 1, 128>}, {pipeline_mode = #tpu.pipeline_mode<synchronous>, transform_indices = @transform_11, window_bounds = array<i64: 128, 32>}, {pipeline_mode = #tpu.pipeline_mode<synchronous>, transform_indices = @transform_12, window_bounds = array<i64: 1, 32>}, {pipeline_mode = #tpu.pipeline_mode<synchronous>, transform_indices = @transform_13, window_bounds = array<i64: 16, 32>}]} {
    %c0 = arith.constant 0 : index
    %c0_0 = arith.constant 0 : index
    %0 = vector.load %arg1[%c0, %c0_0] : memref<16x32xf32, #tpu.memory_space<vmem>>, vector<16x32xf32>
    %c0_1 = arith.constant 0 : index
    %c0_2 = arith.constant 0 : index
    %1 = vector.load %arg2[%c0_1, %c0_2] : memref<1x32xf32, #tpu.memory_space<vmem>>, vector<1x32xf32>
    %2 = vector.shape_cast %1 : vector<1x32xf32> to vector<32xf32>
    %c0_3 = arith.constant 0 : index
    %c0_4 = arith.constant 0 : index
    %3 = vector.load %arg3[%c0_3, %c0_4] : memref<1x32xf32, #tpu.memory_space<vmem>>, vector<1x32xf32>
    %4 = vector.shape_cast %3 : vector<1x32xf32> to vector<32xf32>
    %cst = arith.constant dense<0.000000e+00> : vector<16xf32>
    %5 = vector.multi_reduction <add>, %0, %cst [1] : vector<16x32xf32> to vector<16xf32>
    %6 = vector.shape_cast %5 : vector<16xf32> to vector<16x1xf32>
    %cst_5 = arith.constant 3.200000e+01 : f32
    %7 = vector.broadcast %cst_5 : f32 to vector<16x1xf32>
    %8 = arith.divf %6, %7 : vector<16x1xf32>
    %9 = vector.broadcast %8 : vector<16x1xf32> to vector<16x32xf32>
    %10 = arith.subf %0, %9 : vector<16x32xf32>
    %11 = arith.mulf %10, %10 : vector<16x32xf32>
    %cst_6 = arith.constant dense<0.000000e+00> : vector<16xf32>
    %12 = vector.multi_reduction <add>, %11, %cst_6 [1] : vector<16x32xf32> to vector<16xf32>
    %13 = vector.shape_cast %12 : vector<16xf32> to vector<16x1xf32>
    %cst_7 = arith.constant 3.200000e+01 : f32
    %14 = vector.broadcast %cst_7 : f32 to vector<16x1xf32>
    %15 = arith.divf %13, %14 : vector<16x1xf32>
    %cst_8 = arith.constant 9.99999974E-6 : f32
    %16 = vector.broadcast %cst_8 : f32 to vector<16x1xf32>
    %17 = arith.addf %15, %16 : vector<16x1xf32>
    %18 = math.rsqrt %17 : vector<16x1xf32>
    %19 = vector.broadcast %18 : vector<16x1xf32> to vector<16x32xf32>
    %20 = arith.mulf %10, %19 : vector<16x32xf32>
    %21 = vector.shape_cast %2 : vector<32xf32> to vector<1x32xf32>
    %22 = vector.broadcast %21 : vector<1x32xf32> to vector<16x32xf32>
    %23 = arith.mulf %20, %22 : vector<16x32xf32>
    %24 = vector.shape_cast %4 : vector<32xf32> to vector<1x32xf32>
    %25 = vector.broadcast %24 : vector<1x32xf32> to vector<16x32xf32>
    %26 = arith.addf %23, %25 : vector<16x32xf32>
    %c0_9 = arith.constant 0 : index
    %c0_10 = arith.constant 0 : index
    %27 = vector.load %arg4[%c0_9, %c0_10] : memref<32x96xf32, #tpu.memory_space<vmem>>, vector<32x96xf32>
    %cst_11 = arith.constant dense<0.000000e+00> : vector<16x96xf32>
    %28 = tpu.matmul %26, %27, %cst_11 {dimension_numbers = #tpu.dot_dimension_numbers<[1], [0], [0], [1], [0, 0, 1, 1], [], []>} : vector<16x32xf32>, vector<32x96xf32>, vector<16x96xf32> -> vector<16x96xf32>
    %c0_12 = arith.constant 0 : index
    %c0_13 = arith.constant 0 : index
    %29 = vector.load %arg5[%c0_12, %c0_13] : memref<1x96xf32, #tpu.memory_space<vmem>>, vector<1x96xf32>
    %30 = vector.shape_cast %29 : vector<1x96xf32> to vector<96xf32>
    %31 = vector.shape_cast %30 : vector<96xf32> to vector<1x96xf32>
    %32 = vector.broadcast %31 : vector<1x96xf32> to vector<16x96xf32>
    %33 = arith.addf %28, %32 : vector<16x96xf32>
    %34 = vector.extract_strided_slice %33 {offsets = [0, 0], sizes = [8, 8], strides = [1, 1]} : vector<16x96xf32> to vector<8x8xf32>
    %35 = vector.extract_strided_slice %33 {offsets = [0, 32], sizes = [8, 8], strides = [1, 1]} : vector<16x96xf32> to vector<8x8xf32>
    %36 = vector.extract_strided_slice %33 {offsets = [0, 64], sizes = [8, 8], strides = [1, 1]} : vector<16x96xf32> to vector<8x8xf32>
    %37 = vector.extract_strided_slice %33 {offsets = [8, 0], sizes = [8, 8], strides = [1, 1]} : vector<16x96xf32> to vector<8x8xf32>
    %38 = vector.extract_strided_slice %33 {offsets = [8, 32], sizes = [8, 8], strides = [1, 1]} : vector<16x96xf32> to vector<8x8xf32>
    %39 = vector.extract_strided_slice %33 {offsets = [8, 64], sizes = [8, 8], strides = [1, 1]} : vector<16x96xf32> to vector<8x8xf32>
    %40 = vector.extract_strided_slice %33 {offsets = [0, 8], sizes = [8, 8], strides = [1, 1]} : vector<16x96xf32> to vector<8x8xf32>
    %41 = vector.extract_strided_slice %33 {offsets = [0, 40], sizes = [8, 8], strides = [1, 1]} : vector<16x96xf32> to vector<8x8xf32>
    %42 = vector.extract_strided_slice %33 {offsets = [0, 72], sizes = [8, 8], strides = [1, 1]} : vector<16x96xf32> to vector<8x8xf32>
    %43 = vector.extract_strided_slice %33 {offsets = [8, 8], sizes = [8, 8], strides = [1, 1]} : vector<16x96xf32> to vector<8x8xf32>
    %44 = vector.extract_strided_slice %33 {offsets = [8, 40], sizes = [8, 8], strides = [1, 1]} : vector<16x96xf32> to vector<8x8xf32>
    %45 = vector.extract_strided_slice %33 {offsets = [8, 72], sizes = [8, 8], strides = [1, 1]} : vector<16x96xf32> to vector<8x8xf32>
    %46 = vector.extract_strided_slice %33 {offsets = [0, 16], sizes = [8, 8], strides = [1, 1]} : vector<16x96xf32> to vector<8x8xf32>
    %47 = vector.extract_strided_slice %33 {offsets = [0, 48], sizes = [8, 8], strides = [1, 1]} : vector<16x96xf32> to vector<8x8xf32>
    %48 = vector.extract_strided_slice %33 {offsets = [0, 80], sizes = [8, 8], strides = [1, 1]} : vector<16x96xf32> to vector<8x8xf32>
    %49 = vector.extract_strided_slice %33 {offsets = [8, 16], sizes = [8, 8], strides = [1, 1]} : vector<16x96xf32> to vector<8x8xf32>
    %50 = vector.extract_strided_slice %33 {offsets = [8, 48], sizes = [8, 8], strides = [1, 1]} : vector<16x96xf32> to vector<8x8xf32>
    %51 = vector.extract_strided_slice %33 {offsets = [8, 80], sizes = [8, 8], strides = [1, 1]} : vector<16x96xf32> to vector<8x8xf32>
    %52 = vector.extract_strided_slice %33 {offsets = [0, 24], sizes = [8, 8], strides = [1, 1]} : vector<16x96xf32> to vector<8x8xf32>
    %53 = vector.extract_strided_slice %33 {offsets = [0, 56], sizes = [8, 8], strides = [1, 1]} : vector<16x96xf32> to vector<8x8xf32>
    %54 = vector.extract_strided_slice %33 {offsets = [0, 88], sizes = [8, 8], strides = [1, 1]} : vector<16x96xf32> to vector<8x8xf32>
    %55 = vector.extract_strided_slice %33 {offsets = [8, 24], sizes = [8, 8], strides = [1, 1]} : vector<16x96xf32> to vector<8x8xf32>
    %56 = vector.extract_strided_slice %33 {offsets = [8, 56], sizes = [8, 8], strides = [1, 1]} : vector<16x96xf32> to vector<8x8xf32>
    %57 = vector.extract_strided_slice %33 {offsets = [8, 88], sizes = [8, 8], strides = [1, 1]} : vector<16x96xf32> to vector<8x8xf32>
    %58 = vector.shape_cast %34 : vector<8x8xf32> to vector<1x8x8xf32>
    %59 = vector.shape_cast %37 : vector<8x8xf32> to vector<1x8x8xf32>
    %60 = vector.shape_cast %40 : vector<8x8xf32> to vector<1x8x8xf32>
    %61 = vector.shape_cast %43 : vector<8x8xf32> to vector<1x8x8xf32>
    %62 = vector.shape_cast %46 : vector<8x8xf32> to vector<1x8x8xf32>
    %63 = vector.shape_cast %49 : vector<8x8xf32> to vector<1x8x8xf32>
    %64 = vector.shape_cast %52 : vector<8x8xf32> to vector<1x8x8xf32>
    %65 = vector.shape_cast %55 : vector<8x8xf32> to vector<1x8x8xf32>
    %66 = tpu.concatenate %58, %59, %60, %61, %62, %63, %64, %65 in 0 : vector<1x8x8xf32>, vector<1x8x8xf32>, vector<1x8x8xf32>, vector<1x8x8xf32>, vector<1x8x8xf32>, vector<1x8x8xf32>, vector<1x8x8xf32>, vector<1x8x8xf32> -> vector<8x8x8xf32>
    %67 = vector.shape_cast %35 : vector<8x8xf32> to vector<1x8x8xf32>
    %68 = vector.shape_cast %38 : vector<8x8xf32> to vector<1x8x8xf32>
    %69 = vector.shape_cast %41 : vector<8x8xf32> to vector<1x8x8xf32>
    %70 = vector.shape_cast %44 : vector<8x8xf32> to vector<1x8x8xf32>
    %71 = vector.shape_cast %47 : vector<8x8xf32> to vector<1x8x8xf32>
    %72 = vector.shape_cast %50 : vector<8x8xf32> to vector<1x8x8xf32>
    %73 = vector.shape_cast %53 : vector<8x8xf32> to vector<1x8x8xf32>
    %74 = vector.shape_cast %56 : vector<8x8xf32> to vector<1x8x8xf32>
    %75 = tpu.concatenate %67, %68, %69, %70, %71, %72, %73, %74 in 0 : vector<1x8x8xf32>, vector<1x8x8xf32>, vector<1x8x8xf32>, vector<1x8x8xf32>, vector<1x8x8xf32>, vector<1x8x8xf32>, vector<1x8x8xf32>, vector<1x8x8xf32> -> vector<8x8x8xf32>
    %76 = vector.shape_cast %36 : vector<8x8xf32> to vector<1x8x8xf32>
    %77 = vector.shape_cast %39 : vector<8x8xf32> to vector<1x8x8xf32>
    %78 = vector.shape_cast %42 : vector<8x8xf32> to vector<1x8x8xf32>
    %79 = vector.shape_cast %45 : vector<8x8xf32> to vector<1x8x8xf32>
    %80 = vector.shape_cast %48 : vector<8x8xf32> to vector<1x8x8xf32>
    %81 = vector.shape_cast %51 : vector<8x8xf32> to vector<1x8x8xf32>
    %82 = vector.shape_cast %54 : vector<8x8xf32> to vector<1x8x8xf32>
    %83 = vector.shape_cast %57 : vector<8x8xf32> to vector<1x8x8xf32>
    %84 = tpu.concatenate %76, %77, %78, %79, %80, %81, %82, %83 in 0 : vector<1x8x8xf32>, vector<1x8x8xf32>, vector<1x8x8xf32>, vector<1x8x8xf32>, vector<1x8x8xf32>, vector<1x8x8xf32>, vector<1x8x8xf32>, vector<1x8x8xf32> -> vector<8x8x8xf32>
    %cst_14 = arith.constant 0.353553385 : f32
    %85 = vector.broadcast %cst_14 : f32 to vector<8x8x8xf32>
    %86 = arith.mulf %66, %85 : vector<8x8x8xf32>
    "tpu.trace_start"() <{level = 10 : i32, message = "nqd,nkd->nqk"}> : () -> ()
    %cst_15 = arith.constant dense<0.000000e+00> : vector<8x8x8xf32>
    %87 = tpu.matmul %86, %75, %cst_15 {dimension_numbers = #tpu.dot_dimension_numbers<[2], [2], [1], [1], [0, 0, 0, 1, 1, 1], [0], [0]>} : vector<8x8x8xf32>, vector<8x8x8xf32>, vector<8x8x8xf32> -> vector<8x8x8xf32>
    "tpu.trace_stop"() : () -> ()
    %88 = tpu.iota {dimensions = array<i32: 0>} : vector<8x8xi32>
    %89 = tpu.iota {dimensions = array<i32: 1>} : vector<8x8xi32>
    %90 = arith.cmpi sle, %89, %88 : vector<8x8xi32>
    %91 = vector.shape_cast %90 : vector<8x8xi1> to vector<1x8x8xi1>
    %cst_16 = arith.constant -1.000000e+30 : f32
    %92 = vector.shape_cast %91 : vector<1x8x8xi1> to vector<1x8x8xi1>
    %93 = vector.broadcast %92 : vector<1x8x8xi1> to vector<8x8x8xi1>
    %94 = vector.broadcast %cst_16 : f32 to vector<8x8x8xf32>
    %95 = arith.select %93, %87, %94 : vector<8x8x8xi1>, vector<8x8x8xf32>
    %cst_17 = arith.constant dense<0xFF800000> : vector<8x8xf32>
    %96 = vector.multi_reduction <maximumf>, %95, %cst_17 [2] : vector<8x8x8xf32> to vector<8x8xf32>
    %97 = vector.shape_cast %96 : vector<8x8xf32> to vector<8x8x1xf32>
    %98 = vector.broadcast %97 : vector<8x8x1xf32> to vector<8x8x8xf32>
    %99 = arith.subf %95, %98 : vector<8x8x8xf32>
    %100 = math.exp %99 : vector<8x8x8xf32>
    %cst_18 = arith.constant dense<0.000000e+00> : vector<8x8xf32>
    %101 = vector.multi_reduction <add>, %100, %cst_18 [2] : vector<8x8x8xf32> to vector<8x8xf32>
    %102 = vector.shape_cast %101 : vector<8x8xf32> to vector<8x8x1xf32>
    %103 = tpu.reciprocal %102 {approx = true} : vector<8x8x1xf32> -> vector<8x8x1xf32>
    %104 = vector.broadcast %103 : vector<8x8x1xf32> to vector<8x8x8xf32>
    %105 = arith.mulf %100, %104 : vector<8x8x8xf32>
    "tpu.trace_start"() <{level = 10 : i32, message = "nqk,nkd->nqd"}> : () -> ()
    %cst_19 = arith.constant dense<0.000000e+00> : vector<8x8x8xf32>
    %106 = tpu.matmul %105, %84, %cst_19 {dimension_numbers = #tpu.dot_dimension_numbers<[2], [1], [1], [2], [0, 0, 0, 1, 1, 2], [0], [0]>} : vector<8x8x8xf32>, vector<8x8x8xf32>, vector<8x8x8xf32> -> vector<8x8x8xf32>
    %cst_20 = arith.constant 0.000000e+00 : f32
    "tpu.trace_stop"() : () -> ()
    %107 = vector.broadcast %cst_20 : f32 to vector<16x32xf32>
    %108 = vector.extract_strided_slice %106 {offsets = [0, 0, 0], sizes = [2, 8, 8], strides = [1, 1, 1]} : vector<8x8x8xf32> to vector<2x8x8xf32>
    %109 = vector.shape_cast %108 : vector<2x8x8xf32> to vector<16x8xf32>
    %c0_21 = arith.constant 0 : index
    %c0_22 = arith.constant 0 : index
    %110 = vector.load %arg6[%c0_21, %c0_22] : memref<32x32xf32, #tpu.memory_space<vmem>>, vector<8x32xf32>
    %cst_23 = arith.constant dense<0.000000e+00> : vector<16x32xf32>
    %111 = tpu.matmul %109, %110, %cst_23 {dimension_numbers = #tpu.dot_dimension_numbers<[1], [0], [0], [1], [0, 0, 1, 1], [], []>} : vector<16x8xf32>, vector<8x32xf32>, vector<16x32xf32> -> vector<16x32xf32>
    %112 = arith.addf %107, %111 : vector<16x32xf32>
    %113 = vector.extract_strided_slice %106 {offsets = [2, 0, 0], sizes = [2, 8, 8], strides = [1, 1, 1]} : vector<8x8x8xf32> to vector<2x8x8xf32>
    %114 = vector.shape_cast %113 : vector<2x8x8xf32> to vector<16x8xf32>
    %c8 = arith.constant 8 : index
    %c0_24 = arith.constant 0 : index
    %115 = vector.load %arg6[%c8, %c0_24] : memref<32x32xf32, #tpu.memory_space<vmem>>, vector<8x32xf32>
    %cst_25 = arith.constant dense<0.000000e+00> : vector<16x32xf32>
    %116 = tpu.matmul %114, %115, %cst_25 {dimension_numbers = #tpu.dot_dimension_numbers<[1], [0], [0], [1], [0, 0, 1, 1], [], []>} : vector<16x8xf32>, vector<8x32xf32>, vector<16x32xf32> -> vector<16x32xf32>
    %117 = arith.addf %112, %116 : vector<16x32xf32>
    %118 = vector.extract_strided_slice %106 {offsets = [4, 0, 0], sizes = [2, 8, 8], strides = [1, 1, 1]} : vector<8x8x8xf32> to vector<2x8x8xf32>
    %119 = vector.shape_cast %118 : vector<2x8x8xf32> to vector<16x8xf32>
    %c16 = arith.constant 16 : index
    %c0_26 = arith.constant 0 : index
    %120 = vector.load %arg6[%c16, %c0_26] : memref<32x32xf32, #tpu.memory_space<vmem>>, vector<8x32xf32>
    %cst_27 = arith.constant dense<0.000000e+00> : vector<16x32xf32>
    %121 = tpu.matmul %119, %120, %cst_27 {dimension_numbers = #tpu.dot_dimension_numbers<[1], [0], [0], [1], [0, 0, 1, 1], [], []>} : vector<16x8xf32>, vector<8x32xf32>, vector<16x32xf32> -> vector<16x32xf32>
    %122 = arith.addf %117, %121 : vector<16x32xf32>
    %123 = vector.extract_strided_slice %106 {offsets = [6, 0, 0], sizes = [2, 8, 8], strides = [1, 1, 1]} : vector<8x8x8xf32> to vector<2x8x8xf32>
    %124 = vector.shape_cast %123 : vector<2x8x8xf32> to vector<16x8xf32>
    %c24 = arith.constant 24 : index
    %c0_28 = arith.constant 0 : index
    %125 = vector.load %arg6[%c24, %c0_28] : memref<32x32xf32, #tpu.memory_space<vmem>>, vector<8x32xf32>
    %cst_29 = arith.constant dense<0.000000e+00> : vector<16x32xf32>
    %126 = tpu.matmul %124, %125, %cst_29 {dimension_numbers = #tpu.dot_dimension_numbers<[1], [0], [0], [1], [0, 0, 1, 1], [], []>} : vector<16x8xf32>, vector<8x32xf32>, vector<16x32xf32> -> vector<16x32xf32>
    %127 = arith.addf %122, %126 : vector<16x32xf32>
    %128 = arith.addf %0, %127 : vector<16x32xf32>
    %c0_30 = arith.constant 0 : index
    %c0_31 = arith.constant 0 : index
    %129 = vector.load %arg7[%c0_30, %c0_31] : memref<1x32xf32, #tpu.memory_space<vmem>>, vector<1x32xf32>
    %130 = vector.shape_cast %129 : vector<1x32xf32> to vector<32xf32>
    %131 = vector.shape_cast %130 : vector<32xf32> to vector<1x32xf32>
    %132 = vector.broadcast %131 : vector<1x32xf32> to vector<16x32xf32>
    %133 = arith.addf %128, %132 : vector<16x32xf32>
    %c0_32 = arith.constant 0 : index
    %c0_33 = arith.constant 0 : index
    %134 = vector.load %arg8[%c0_32, %c0_33] : memref<1x32xf32, #tpu.memory_space<vmem>>, vector<1x32xf32>
    %135 = vector.shape_cast %134 : vector<1x32xf32> to vector<32xf32>
    %c0_34 = arith.constant 0 : index
    %c0_35 = arith.constant 0 : index
    %136 = vector.load %arg9[%c0_34, %c0_35] : memref<1x32xf32, #tpu.memory_space<vmem>>, vector<1x32xf32>
    %137 = vector.shape_cast %136 : vector<1x32xf32> to vector<32xf32>
    %cst_36 = arith.constant dense<0.000000e+00> : vector<16xf32>
    %138 = vector.multi_reduction <add>, %133, %cst_36 [1] : vector<16x32xf32> to vector<16xf32>
    %139 = vector.shape_cast %138 : vector<16xf32> to vector<16x1xf32>
    %cst_37 = arith.constant 3.200000e+01 : f32
    %140 = vector.broadcast %cst_37 : f32 to vector<16x1xf32>
    %141 = arith.divf %139, %140 : vector<16x1xf32>
    %142 = vector.broadcast %141 : vector<16x1xf32> to vector<16x32xf32>
    %143 = arith.subf %133, %142 : vector<16x32xf32>
    %144 = arith.mulf %143, %143 : vector<16x32xf32>
    %cst_38 = arith.constant dense<0.000000e+00> : vector<16xf32>
    %145 = vector.multi_reduction <add>, %144, %cst_38 [1] : vector<16x32xf32> to vector<16xf32>
    %146 = vector.shape_cast %145 : vector<16xf32> to vector<16x1xf32>
    %cst_39 = arith.constant 3.200000e+01 : f32
    %147 = vector.broadcast %cst_39 : f32 to vector<16x1xf32>
    %148 = arith.divf %146, %147 : vector<16x1xf32>
    %cst_40 = arith.constant 9.99999974E-6 : f32
    %149 = vector.broadcast %cst_40 : f32 to vector<16x1xf32>
    %150 = arith.addf %148, %149 : vector<16x1xf32>
    %151 = math.rsqrt %150 : vector<16x1xf32>
    %152 = vector.broadcast %151 : vector<16x1xf32> to vector<16x32xf32>
    %153 = arith.mulf %143, %152 : vector<16x32xf32>
    %154 = vector.shape_cast %135 : vector<32xf32> to vector<1x32xf32>
    %155 = vector.broadcast %154 : vector<1x32xf32> to vector<16x32xf32>
    %156 = arith.mulf %153, %155 : vector<16x32xf32>
    %157 = vector.shape_cast %137 : vector<32xf32> to vector<1x32xf32>
    %158 = vector.broadcast %157 : vector<1x32xf32> to vector<16x32xf32>
    %159 = arith.addf %156, %158 : vector<16x32xf32>
    %c0_41 = arith.constant 0 : index
    %c0_42 = arith.constant 0 : index
    %160 = vector.load %arg10[%c0_41, %c0_42] : memref<32x128xf32, #tpu.memory_space<vmem>>, vector<32x128xf32>
    %cst_43 = arith.constant dense<0.000000e+00> : vector<16x128xf32>
    %161 = tpu.matmul %159, %160, %cst_43 {dimension_numbers = #tpu.dot_dimension_numbers<[1], [0], [0], [1], [0, 0, 1, 1], [], []>} : vector<16x32xf32>, vector<32x128xf32>, vector<16x128xf32> -> vector<16x128xf32>
    %c0_44 = arith.constant 0 : index
    %c0_45 = arith.constant 0 : index
    %162 = vector.load %arg11[%c0_44, %c0_45] : memref<1x128xf32, #tpu.memory_space<vmem>>, vector<1x128xf32>
    %163 = vector.shape_cast %162 : vector<1x128xf32> to vector<128xf32>
    %164 = vector.shape_cast %163 : vector<128xf32> to vector<1x128xf32>
    %165 = vector.broadcast %164 : vector<1x128xf32> to vector<16x128xf32>
    %166 = arith.addf %161, %165 : vector<16x128xf32>
    %cst_46 = arith.constant 5.000000e-01 : f32
    %167 = vector.broadcast %cst_46 : f32 to vector<16x128xf32>
    %168 = arith.mulf %167, %166 : vector<16x128xf32>
    %cst_47 = arith.constant 0.636619746 : f32
    %169 = math.sqrt %cst_47 : f32
    %170 = arith.mulf %166, %166 : vector<16x128xf32>
    %171 = arith.mulf %166, %170 : vector<16x128xf32>
    %cst_48 = arith.constant 4.471500e-02 : f32
    %172 = vector.broadcast %cst_48 : f32 to vector<16x128xf32>
    %173 = arith.mulf %172, %171 : vector<16x128xf32>
    %174 = arith.addf %166, %173 : vector<16x128xf32>
    %175 = vector.broadcast %169 : f32 to vector<16x128xf32>
    %176 = arith.mulf %175, %174 : vector<16x128xf32>
    %177 = math.tanh %176 : vector<16x128xf32>
    %cst_49 = arith.constant 1.000000e+00 : f32
    %178 = vector.broadcast %cst_49 : f32 to vector<16x128xf32>
    %179 = arith.addf %178, %177 : vector<16x128xf32>
    %180 = arith.mulf %168, %179 : vector<16x128xf32>
    %c0_50 = arith.constant 0 : index
    %c0_51 = arith.constant 0 : index
    %181 = vector.load %arg12[%c0_50, %c0_51] : memref<128x32xf32, #tpu.memory_space<vmem>>, vector<128x32xf32>
    %cst_52 = arith.constant dense<0.000000e+00> : vector<16x32xf32>
    %182 = tpu.matmul %180, %181, %cst_52 {dimension_numbers = #tpu.dot_dimension_numbers<[1], [0], [0], [1], [0, 0, 1, 1], [], []>} : vector<16x128xf32>, vector<128x32xf32>, vector<16x32xf32> -> vector<16x32xf32>
    %c0_53 = arith.constant 0 : index
    %c0_54 = arith.constant 0 : index
    %183 = vector.load %arg13[%c0_53, %c0_54] : memref<1x32xf32, #tpu.memory_space<vmem>>, vector<1x32xf32>
    %184 = vector.shape_cast %183 : vector<1x32xf32> to vector<32xf32>
    %185 = vector.shape_cast %184 : vector<32xf32> to vector<1x32xf32>
    %186 = vector.broadcast %185 : vector<1x32xf32> to vector<16x32xf32>
    %187 = arith.addf %182, %186 : vector<16x32xf32>
    %188 = arith.addf %133, %187 : vector<16x32xf32>
    %c0_55 = arith.constant 0 : index
    %c0_56 = arith.constant 0 : index
    %189 = vector.load %arg14[%c0_55, %c0_56] : memref<16x32xf32, #tpu.memory_space<vmem>>, vector<16x32xf32>
    tpu.vector_store %arg14[%c0_55, %c0_56], %188 {strides = array<i32>} : memref<16x32xf32, #tpu.memory_space<vmem>>, vector<16x32xf32>,
    return
  }
  func.func @transform_0(%arg0: i32) -> (i32, i32) {
    %c0_i32 = arith.constant 0 : i32
    %c0_i32_0 = arith.constant 0 : i32
    %c0_i32_1 = arith.constant 0 : i32
    return %c0_i32, %c0_i32_0 : i32, i32
  }
  func.func @transform_1(%arg0: i32) -> (i32, i32) {
    %c0_i32 = arith.constant 0 : i32
    %c0_i32_0 = arith.constant 0 : i32
    %c0_i32_1 = arith.constant 0 : i32
    return %c0_i32, %c0_i32_0 : i32, i32
  }
  func.func @transform_2(%arg0: i32) -> (i32, i32) {
    %c0_i32 = arith.constant 0 : i32
    %c0_i32_0 = arith.constant 0 : i32
    %c0_i32_1 = arith.constant 0 : i32
    return %c0_i32, %c0_i32_0 : i32, i32
  }
  func.func @transform_3(%arg0: i32) -> (i32, i32) {
    %c0_i32 = arith.constant 0 : i32
    %c0_i32_0 = arith.constant 0 : i32
    %c0_i32_1 = arith.constant 0 : i32
    return %c0_i32, %c0_i32_0 : i32, i32
  }
  func.func @transform_4(%arg0: i32) -> (i32, i32) {
    %c0_i32 = arith.constant 0 : i32
    %c0_i32_0 = arith.constant 0 : i32
    %c0_i32_1 = arith.constant 0 : i32
    return %c0_i32, %c0_i32_0 : i32, i32
  }
  func.func @transform_5(%arg0: i32) -> (i32, i32) {
    %c0_i32 = arith.constant 0 : i32
    %c0_i32_0 = arith.constant 0 : i32
    %c0_i32_1 = arith.constant 0 : i32
    return %c0_i32, %c0_i32_0 : i32, i32
  }
  func.func @transform_6(%arg0: i32) -> (i32, i32) {
    %c0_i32 = arith.constant 0 : i32
    %c0_i32_0 = arith.constant 0 : i32
    %c0_i32_1 = arith.constant 0 : i32
    return %c0_i32, %c0_i32_0 : i32, i32
  }
  func.func @transform_7(%arg0: i32) -> (i32, i32) {
    %c0_i32 = arith.constant 0 : i32
    %c0_i32_0 = arith.constant 0 : i32
    %c0_i32_1 = arith.constant 0 : i32
    return %c0_i32, %c0_i32_0 : i32, i32
  }
  func.func @transform_8(%arg0: i32) -> (i32, i32) {
    %c0_i32 = arith.constant 0 : i32
    %c0_i32_0 = arith.constant 0 : i32
    %c0_i32_1 = arith.constant 0 : i32
    return %c0_i32, %c0_i32_0 : i32, i32
  }
  func.func @transform_9(%arg0: i32) -> (i32, i32) {
    %c0_i32 = arith.constant 0 : i32
    %c0_i32_0 = arith.constant 0 : i32
    %c0_i32_1 = arith.constant 0 : i32
    return %c0_i32, %c0_i32_0 : i32, i32
  }
  func.func @transform_10(%arg0: i32) -> (i32, i32) {
    %c0_i32 = arith.constant 0 : i32
    %c0_i32_0 = arith.constant 0 : i32
    %c0_i32_1 = arith.constant 0 : i32
    return %c0_i32, %c0_i32_0 : i32, i32
  }
  func.func @transform_11(%arg0: i32) -> (i32, i32) {
    %c0_i32 = arith.constant 0 : i32
    %c0_i32_0 = arith.constant 0 : i32
    %c0_i32_1 = arith.constant 0 : i32
    return %c0_i32, %c0_i32_0 : i32, i32
  }
  func.func @transform_12(%arg0: i32) -> (i32, i32) {
    %c0_i32 = arith.constant 0 : i32
    %c0_i32_0 = arith.constant 0 : i32
    %c0_i32_1 = arith.constant 0 : i32
    return %c0_i32, %c0_i32_0 : i32, i32
  }
  func.func @transform_13(%arg0: i32) -> (i32, i32) {
    %c0_i32 = arith.constant 0 : i32
    %c0_i32_0 = arith.constant 0 : i32
    %c0_i32_1 = arith.constant 0 : i32
    return %c0_i32, %c0_i32_0 : i32, i32
  }
}

</mosaic_0001>

<llo_original>
// kernel: tpu_custom_call.1
$region0: #{tpu_custom_call.1}
  #allocation0 [shape = 'u32[]', space=smem, size = 0x4, offset = 0x4, fixed_abs, tag = 'smem constant byte address 0x4 - core index']
  #allocation1 [shape = 'u32[72,128]{1,0:T(1,128)}', space=vmem, size = 0x9000, scoped, tag = 'internal scratch']
  %s0 = inlined_call_operand.vmem [shape: f32[16,32], index: 0, kind: input, shape index: {}]
  %s1 = inlined_call_operand.vmem [shape: f32[1,32], index: 1, kind: input, shape index: {}]
  %s2 = inlined_call_operand.vmem [shape: f32[1,32], index: 2, kind: input, shape index: {}]
  %s3 = inlined_call_operand.vmem [shape: f32[32,96], index: 3, kind: input, shape index: {}]
  %s4 = inlined_call_operand.vmem [shape: f32[1,96], index: 4, kind: input, shape index: {}]
  %s5 = inlined_call_operand.vmem [shape: f32[32,32], index: 5, kind: input, shape index: {}]
  %s6 = inlined_call_operand.vmem [shape: f32[1,32], index: 6, kind: input, shape index: {}]
  %s7 = inlined_call_operand.vmem [shape: f32[1,32], index: 7, kind: input, shape index: {}]
  %s8 = inlined_call_operand.vmem [shape: f32[1,32], index: 8, kind: input, shape index: {}]
  %s9 = inlined_call_operand.vmem [shape: f32[32,128], index: 9, kind: input, shape index: {}]
  %s10 = inlined_call_operand.vmem [shape: f32[1,128], index: 10, kind: input, shape index: {}]
  %s11 = inlined_call_operand.vmem [shape: f32[128,32], index: 11, kind: input, shape index: {}]
  %s12 = inlined_call_operand.vmem [shape: f32[1,32], index: 12, kind: input, shape index: {}]
  %s13 = inlined_call_operand.hbm [shape: f32[16,32], index: 13, kind: output, shape index: {}]
  %s14 = sld [smem:[#allocation0]]
  $region62: #{tpu_custom_call.1} parent=0
    _
  %s16 = ssub.s32 1, %s14
  %s17 = scalar_select 0, %s16, %s14
  $region1: #{tpu_custom_call.1} parent=0
    #allocation2 [shape = 'u8[8192]{0}', space=vmem, size = 0x2000, scoped, tag = 'output window, operand 0, single buffered']
    #allocation3 [shape = 's32[1]{0}', space=sflag, size = 0x4, scoped, tag = 'scoped memory for tpu_custom_call.1']
    %18 = vsyncpa [#allocation3], 0
    // Predicated region
    $region2: #{tpu_custom_call.1} parent=1 // pred_check
      _
    $region3: #{tpu_custom_call.1} parent=1 // pred_check_branch
      %20 = sbr.rel (0) target = $region5
    $region4: #{tpu_custom_call.1} parent=1 // pred_region
      _
    $region5: #{tpu_custom_call.1} parent=1 // pred_fallthru
      _
    // Predicated region
    $region6: #{tpu_custom_call.1} parent=1 // pred_check
      _
    $region7: #{tpu_custom_call.1} parent=1 // pred_check_branch
      %22 = sbr.rel (0) target = $region9
    $region8: #{tpu_custom_call.1} parent=1 // pred_region
      _
    $region9: #{tpu_custom_call.1} parent=1 // pred_fallthru
      _
    // Predicated region
    $region10: #{tpu_custom_call.1} parent=1 // pred_check
      _
    $region11: #{tpu_custom_call.1} parent=1 // pred_check_branch
      %24 = sbr.rel (0) target = $region13
    $region12: #{tpu_custom_call.1} parent=1 // pred_region
      _
    $region13: #{tpu_custom_call.1} parent=1 // pred_fallthru
      _
    // Predicated region
    $region14: #{tpu_custom_call.1} parent=1 // pred_check
      _
    $region15: #{tpu_custom_call.1} parent=1 // pred_check_branch
      %26 = sbr.rel (0) target = $region17
    $region16: #{tpu_custom_call.1} parent=1 // pred_region
      _
    $region17: #{tpu_custom_call.1} parent=1 // pred_fallthru
      _
    // Predicated region
    $region18: #{tpu_custom_call.1} parent=1 // pred_check
      _
    $region19: #{tpu_custom_call.1} parent=1 // pred_check_branch
      %28 = sbr.rel (0) target = $region21
    $region20: #{tpu_custom_call.1} parent=1 // pred_region
      _
    $region21: #{tpu_custom_call.1} parent=1 // pred_fallthru
      _
    // Predicated region
    $region22: #{tpu_custom_call.1} parent=1 // pred_check
      _
    $region23: #{tpu_custom_call.1} parent=1 // pred_check_branch
      %30 = sbr.rel (0) target = $region25
    $region24: #{tpu_custom_call.1} parent=1 // pred_region
      _
    $region25: #{tpu_custom_call.1} parent=1 // pred_fallthru
      _
    // Predicated region
    $region26: #{tpu_custom_call.1} parent=1 // pred_check
      _
    $region27: #{tpu_custom_call.1} parent=1 // pred_check_branch
      %32 = sbr.rel (0) target = $region29
    $region28: #{tpu_custom_call.1} parent=1 // pred_region
      _
    $region29: #{tpu_custom_call.1} parent=1 // pred_fallthru
      _
    // Predicated region
    $region30: #{tpu_custom_call.1} parent=1 // pred_check
      _
    $region31: #{tpu_custom_call.1} parent=1 // pred_check_branch
      %34 = sbr.rel (0) target = $region33
    $region32: #{tpu_custom_call.1} parent=1 // pred_region
      _
    $region33: #{tpu_custom_call.1} parent=1 // pred_fallthru
      _
    // Predicated region
    $region34: #{tpu_custom_call.1} parent=1 // pred_check
      _
    $region35: #{tpu_custom_call.1} parent=1 // pred_check_branch
      %36 = sbr.rel (0) target = $region37
    $region36: #{tpu_custom_call.1} parent=1 // pred_region
      _
    $region37: #{tpu_custom_call.1} parent=1 // pred_fallthru
      _
    // Predicated region
    $region38: #{tpu_custom_call.1} parent=1 // pred_check
      _
    $region39: #{tpu_custom_call.1} parent=1 // pred_check_branch
      %38 = sbr.rel (0) target = $region41
    $region40: #{tpu_custom_call.1} parent=1 // pred_region
      _
    $region41: #{tpu_custom_call.1} parent=1 // pred_fallthru
      _
    // Predicated region
    $region42: #{tpu_custom_call.1} parent=1 // pred_check
      _
    $region43: #{tpu_custom_call.1} parent=1 // pred_check_branch
      %40 = sbr.rel (0) target = $region45
    $region44: #{tpu_custom_call.1} parent=1 // pred_region
      _
    $region45: #{tpu_custom_call.1} parent=1 // pred_fallthru
      _
    // Predicated region
    $region46: #{tpu_custom_call.1} parent=1 // pred_check
      _
    $region47: #{tpu_custom_call.1} parent=1 // pred_check_branch
      %42 = sbr.rel (0) target = $region49
    $region48: #{tpu_custom_call.1} parent=1 // pred_region
      _
    $region49: #{tpu_custom_call.1} parent=1 // pred_fallthru
      _
    // Predicated region
    $region50: #{tpu_custom_call.1} parent=1 // pred_check
      _
    $region51: #{tpu_custom_call.1} parent=1 // pred_check_branch
      %44 = sbr.rel (0) target = $region53
    $region52: #{tpu_custom_call.1} parent=1 // pred_region
      _
    $region53: #{tpu_custom_call.1} parent=1 // pred_fallthru
      _
    %v45 = vld [vmem:[%s0] sm:$0xff]
    %v46 = vld [vmem:[%s0 + $0x8] sm:$0xff]
    %v47 = vld [vmem:[%s1] sm:$0x1]
    %v48 = vld [vmem:[%s2] sm:$0x1]
    %vm49 = vcmask 261120
    %v50 = vsel %vm49, %v45, 0.0
    %51 = vadd.xlane.f32.xlu0 %v50
    %v52 = vpop.xlane.xlu0 %51
    %v53 = vsel %vm49, %v46, 0.0
    %54 = vadd.xlane.f32.xlu0 %v53
    %v55 = vpop.xlane.xlu0 %54
    %v56 = vrcp.pop 32.0
    %v57 = vmul.f32 32.0, %v56
    %v58 = vsub.f32 1.0, %v57
    %v59 = vmul.f32 %v56, %v58
    %v60 = vadd.f32 %v56, %v59
    %vm61 = vweird.f32 %v56
    %v62 = vsel %vm61, %v56, %v60
    %v63 = vmul.f32 %v52, %v62
    %v64 = vmul.f32 %v55, %v62
    %v65 = vsub.f32 %v45, %v63
    %v66 = vsub.f32 %v46, %v64
    %v67 = vmul.f32 %v65, %v65
    %v68 = vmul.f32 %v66, %v66
    %v69 = vsel %vm49, %v67, 0.0
    %70 = vadd.xlane.f32.xlu0 %v69
    %v71 = vpop.xlane.xlu0 %70
    %v72 = vsel %vm49, %v68, 0.0
    %73 = vadd.xlane.f32.xlu0 %v72
    %v74 = vpop.xlane.xlu0 %73
    %v75 = vmul.f32 %v71, %v62
    %v76 = vmul.f32 %v74, %v62
    %v77 = vadd.f32 %v75, 1e-05
    %v78 = vadd.f32 %v76, 1e-05
    %v79 = vrsqrt.pop %v77
    %v80 = vmul.f32 %v79, %v77
    %v81 = vmul.f32 %v80, %v79
    %v82 = vmul.f32 0.5, %v81
    %v83 = vsub.f32 1.5, %v82
    %v84 = vmul.f32 %v79, %v83
    %vm85 = vweird.f32 %v77
    %vm86 = vweird.f32 %v79
    %vm87 = vmor %vm85, %vm86
    %v88 = vsel %vm87, %v79, %v84
    %v89 = vrsqrt.pop %v78
    %v90 = vmul.f32 %v89, %v78
    %v91 = vmul.f32 %v90, %v89
    %v92 = vmul.f32 0.5, %v91
    %v93 = vsub.f32 1.5, %v92
    %v94 = vmul.f32 %v89, %v93
    %vm95 = vweird.f32 %v78
    %vm96 = vweird.f32 %v89
    %vm97 = vmor %vm95, %vm96
    %v98 = vsel %vm97, %v89, %v94
    %v99 = vmul.f32 %v65, %v88
    %v100 = vmul.f32 %v66, %v98
    %v102 = vperm.slane %v47, 0
    %v104 = vmul.f32 %v99, %v102
    %v105 = vmul.f32 %v100, %v102
    %v107 = vperm.slane %v48, 0
    %v109 = vadd.f32 %v104, %v107
    %v110 = vadd.f32 %v105, %v107
    %v111 = vld [vmem:[%s3] sm:$0xff]
    %v112 = vld [vmem:[%s3 + $0x8] sm:$0xff]
    %v113 = vld [vmem:[%s3 + $0x10] sm:$0xff]
    %v114 = vld [vmem:[%s3 + $0x18] sm:$0xff]
    %v115 = vld [vmem:[%s4] sm:$0x1]
    %v117 = vperm.slane %v115, 0
    %v120 = vsel %vm49, %v109, 0
    %v123 = vsel %vm49, %v110, 0
    %125 = vmatpush.msra.mxu0 0.0
    %126 = vmatpush.msra.mxu0 0.0
    %127 = vmatpush.msra.mxu0 0.0
    %128 = vmatpush.msra.mxu0 0.0
    %129 = vmatpush.msra.mxu0 0.0
    %130 = vmatpush.msra.mxu0 0.0
    %131 = vmatpush.msra.mxu0 0.0
    %132 = vmatpush.msra.mxu0 0.0
    %133 = vmatpush.msra.mxu0 0.0
    %134 = vmatpush.msra.mxu0 0.0
    %135 = vmatpush.msra.mxu0 0.0
    %136 = vmatpush.msra.mxu0 0.0
    %137 = vmatpush.msra.mxu0 %v114
    %138 = vmatpush.msra.mxu0 %v113
    %139 = vmatpush.msra.mxu0 %v112
    %140 = vmatpush.msra.mxu0 %v111
    %141 = vmatmul.f32.gmra.mxu0 %v120
    %v142 = vpop.f32.mrf.mxu0
    %v143 = vadd.f32 %v117, %v142
    %144 = vmatmul.f32.gmra.mxu0 %v123
    %v145 = vpop.f32.mrf.mxu0
    %v146 = vadd.f32 %v117, %v145
    %147 = vdwg.mxu0
    %149 = vrot.lane.b32.xlu0 %v143, 120
    %v150 = vpop.permute.xlu0 %149
    %153 = vrot.lane.b32.xlu0 %v146, 120
    %v154 = vpop.permute.xlu0 %153
    %156 = vrot.lane.b32.xlu0 %v143, 112
    %v157 = vpop.permute.xlu0 %156
    %159 = vrot.lane.b32.xlu0 %v146, 112
    %v160 = vpop.permute.xlu0 %159
    %162 = vrot.lane.b32.xlu0 %v143, 104
    %v163 = vpop.permute.xlu0 %162
    %165 = vrot.lane.b32.xlu0 %v146, 104
    %v166 = vpop.permute.xlu0 %165
    %v168 = vmul.f32 %v143, 0.35355338
    %v169 = vmul.f32 %v146, 0.35355338
    %v170 = vmul.f32 %v150, 0.35355338
    %v171 = vmul.f32 %v154, 0.35355338
    %v172 = vmul.f32 %v157, 0.35355338
    %v173 = vmul.f32 %v160, 0.35355338
    %v174 = vmul.f32 %v163, 0.35355338
    %v175 = vmul.f32 %v166, 0.35355338
    %176 = vrot.lane.b32.xlu0 %v143, 96
    %v177 = vpop.permute.xlu0 %176
    %vm178 = vcmask 64512
    %v180 = vsel %vm178, %v168, 0
    %v182 = vsel %vm178, %v177, 0
    %184 = vmatpush.xpose.msra.mxu0 0.0
    %185 = vmatpush.xpose.msra.mxu0 0.0
    %186 = vmatpush.xpose.msra.mxu0 0.0
    %187 = vmatpush.xpose.msra.mxu0 0.0
    %188 = vmatpush.xpose.msra.mxu0 0.0
    %189 = vmatpush.xpose.msra.mxu0 0.0
    %190 = vmatpush.xpose.msra.mxu0 0.0
    %191 = vmatpush.xpose.msra.mxu0 0.0
    %192 = vmatpush.xpose.msra.mxu0 0.0
    %193 = vmatpush.xpose.msra.mxu0 0.0
    %194 = vmatpush.xpose.msra.mxu0 0.0
    %195 = vmatpush.xpose.msra.mxu0 0.0
    %196 = vmatpush.xpose.msra.mxu0 0.0
    %197 = vmatpush.xpose.msra.mxu0 0.0
    %198 = vmatpush.xpose.msra.mxu0 0.0
    %199 = vmatpush.xpose.msra.mxu0 %v182
    %200 = vmatmul.f32.gmra.mxu0 %v180
    %v201 = vpop.f32.mrf.mxu0
    %v202 = vadd.f32 0.0, %v201
    %203 = vdwg.mxu0
    %204 = vrot.lane.b32.xlu0 %v146, 96
    %v205 = vpop.permute.xlu0 %204
    %v207 = vsel %vm178, %v169, 0
    %v209 = vsel %vm178, %v205, 0
    %211 = vmatpush.xpose.msra.mxu0 0.0
    %212 = vmatpush.xpose.msra.mxu0 0.0
    %213 = vmatpush.xpose.msra.mxu0 0.0
    %214 = vmatpush.xpose.msra.mxu0 0.0
    %215 = vmatpush.xpose.msra.mxu0 0.0
    %216 = vmatpush.xpose.msra.mxu0 0.0
    %217 = vmatpush.xpose.msra.mxu0 0.0
    %218 = vmatpush.xpose.msra.mxu0 0.0
    %219 = vmatpush.xpose.msra.mxu0 0.0
    %220 = vmatpush.xpose.msra.mxu0 0.0
    %221 = vmatpush.xpose.msra.mxu0 0.0
    %222 = vmatpush.xpose.msra.mxu0 0.0
    %223 = vmatpush.xpose.msra.mxu0 0.0
    %224 = vmatpush.xpose.msra.mxu0 0.0
    %225 = vmatpush.xpose.msra.mxu0 0.0
    %226 = vmatpush.xpose.msra.mxu0 %v209
    %227 = vmatmul.f32.gmra.mxu0 %v207
    %v228 = vpop.f32.mrf.mxu0
    %v229 = vadd.f32 0.0, %v228
    %230 = vdwg.mxu0
    %231 = vrot.lane.b32.xlu0 %v150, 96
    %v232 = vpop.permute.xlu0 %231
    %v234 = vsel %vm178, %v170, 0
    %v236 = vsel %vm178, %v232, 0
    %238 = vmatpush.xpose.msra.mxu0 0.0
    %239 = vmatpush.xpose.msra.mxu0 0.0
    %240 = vmatpush.xpose.msra.mxu0 0.0
    %241 = vmatpush.xpose.msra.mxu0 0.0
    %242 = vmatpush.xpose.msra.mxu0 0.0
    %243 = vmatpush.xpose.msra.mxu0 0.0
    %244 = vmatpush.xpose.msra.mxu0 0.0
    %245 = vmatpush.xpose.msra.mxu0 0.0
    %246 = vmatpush.xpose.msra.mxu0 0.0
    %247 = vmatpush.xpose.msra.mxu0 0.0
    %248 = vmatpush.xpose.msra.mxu0 0.0
    %249 = vmatpush.xpose.msra.mxu0 0.0
    %250 = vmatpush.xpose.msra.mxu0 0.0
    %251 = vmatpush.xpose.msra.mxu0 0.0
    %252 = vmatpush.xpose.msra.mxu0 0.0
    %253 = vmatpush.xpose.msra.mxu0 %v236
    %254 = vmatmul.f32.gmra.mxu0 %v234
    %v255 = vpop.f32.mrf.mxu0
    %v256 = vadd.f32 0.0, %v255
    %257 = vdwg.mxu0
    %258 = vrot.lane.b32.xlu0 %v154, 96
    %v259 = vpop.permute.xlu0 %258
    %v261 = vsel %vm178, %v171, 0
    %v263 = vsel %vm178, %v259, 0
    %265 = vmatpush.xpose.msra.mxu0 0.0
    %266 = vmatpush.xpose.msra.mxu0 0.0
    %267 = vmatpush.xpose.msra.mxu0 0.0
    %268 = vmatpush.xpose.msra.mxu0 0.0
    %269 = vmatpush.xpose.msra.mxu0 0.0
    %270 = vmatpush.xpose.msra.mxu0 0.0
    %271 = vmatpush.xpose.msra.mxu0 0.0
    %272 = vmatpush.xpose.msra.mxu0 0.0
    %273 = vmatpush.xpose.msra.mxu0 0.0
    %274 = vmatpush.xpose.msra.mxu0 0.0
    %275 = vmatpush.xpose.msra.mxu0 0.0
    %276 = vmatpush.xpose.msra.mxu0 0.0
    %277 = vmatpush.xpose.msra.mxu0 0.0
    %278 = vmatpush.xpose.msra.mxu0 0.0
    %279 = vmatpush.xpose.msra.mxu0 0.0
    %280 = vmatpush.xpose.msra.mxu0 %v263
    %281 = vmatmul.f32.gmra.mxu0 %v261
    %v282 = vpop.f32.mrf.mxu0
    %v283 = vadd.f32 0.0, %v282
    %284 = vdwg.mxu0
    %285 = vrot.lane.b32.xlu0 %v157, 96
    %v286 = vpop.permute.xlu0 %285
    %v288 = vsel %vm178, %v172, 0
    %v290 = vsel %vm178, %v286, 0
    %292 = vmatpush.xpose.msra.mxu0 0.0
    %293 = vmatpush.xpose.msra.mxu0 0.0
    %294 = vmatpush.xpose.msra.mxu0 0.0
    %295 = vmatpush.xpose.msra.mxu0 0.0
    %296 = vmatpush.xpose.msra.mxu0 0.0
    %297 = vmatpush.xpose.msra.mxu0 0.0
    %298 = vmatpush.xpose.msra.mxu0 0.0
    %299 = vmatpush.xpose.msra.mxu0 0.0
    %300 = vmatpush.xpose.msra.mxu0 0.0
    %301 = vmatpush.xpose.msra.mxu0 0.0
    %302 = vmatpush.xpose.msra.mxu0 0.0
    %303 = vmatpush.xpose.msra.mxu0 0.0
    %304 = vmatpush.xpose.msra.mxu0 0.0
    %305 = vmatpush.xpose.msra.mxu0 0.0
    %306 = vmatpush.xpose.msra.mxu0 0.0
    %307 = vmatpush.xpose.msra.mxu0 %v290
    %308 = vmatmul.f32.gmra.mxu0 %v288
    %v309 = vpop.f32.mrf.mxu0
    %v310 = vadd.f32 0.0, %v309
    %311 = vdwg.mxu0
    %312 = vrot.lane.b32.xlu0 %v160, 96
    %v313 = vpop.permute.xlu0 %312
    %v315 = vsel %vm178, %v173, 0
    %v317 = vsel %vm178, %v313, 0
    %319 = vmatpush.xpose.msra.mxu0 0.0
    %320 = vmatpush.xpose.msra.mxu0 0.0
    %321 = vmatpush.xpose.msra.mxu0 0.0
    %322 = vmatpush.xpose.msra.mxu0 0.0
    %323 = vmatpush.xpose.msra.mxu0 0.0
    %324 = vmatpush.xpose.msra.mxu0 0.0
    %325 = vmatpush.xpose.msra.mxu0 0.0
    %326 = vmatpush.xpose.msra.mxu0 0.0
    %327 = vmatpush.xpose.msra.mxu0 0.0
    %328 = vmatpush.xpose.msra.mxu0 0.0
    %329 = vmatpush.xpose.msra.mxu0 0.0
    %330 = vmatpush.xpose.msra.mxu0 0.0
    %331 = vmatpush.xpose.msra.mxu0 0.0
    %332 = vmatpush.xpose.msra.mxu0 0.0
    %333 = vmatpush.xpose.msra.mxu0 0.0
    %334 = vmatpush.xpose.msra.mxu0 %v317
    %335 = vmatmul.f32.gmra.mxu0 %v315
    %v336 = vpop.f32.mrf.mxu0
    %v337 = vadd.f32 0.0, %v336
    %338 = vdwg.mxu0
    %339 = vrot.lane.b32.xlu0 %v163, 96
    %v340 = vpop.permute.xlu0 %339
    %v342 = vsel %vm178, %v174, 0
    %v344 = vsel %vm178, %v340, 0
    %346 = vmatpush.xpose.msra.mxu0 0.0
    %347 = vmatpush.xpose.msra.mxu0 0.0
    %348 = vmatpush.xpose.msra.mxu0 0.0
    %349 = vmatpush.xpose.msra.mxu0 0.0
    %350 = vmatpush.xpose.msra.mxu0 0.0
    %351 = vmatpush.xpose.msra.mxu0 0.0
    %352 = vmatpush.xpose.msra.mxu0 0.0
    %353 = vmatpush.xpose.msra.mxu0 0.0
    %354 = vmatpush.xpose.msra.mxu0 0.0
    %355 = vmatpush.xpose.msra.mxu0 0.0
    %356 = vmatpush.xpose.msra.mxu0 0.0
    %357 = vmatpush.xpose.msra.mxu0 0.0
    %358 = vmatpush.xpose.msra.mxu0 0.0
    %359 = vmatpush.xpose.msra.mxu0 0.0
    %360 = vmatpush.xpose.msra.mxu0 0.0
    %361 = vmatpush.xpose.msra.mxu0 %v344
    %362 = vmatmul.f32.gmra.mxu0 %v342
    %v363 = vpop.f32.mrf.mxu0
    %v364 = vadd.f32 0.0, %v363
    %365 = vdwg.mxu0
    %366 = vrot.lane.b32.xlu0 %v166, 96
    %v367 = vpop.permute.xlu0 %366
    %v369 = vsel %vm178, %v175, 0
    %v371 = vsel %vm178, %v367, 0
    %373 = vmatpush.xpose.msra.mxu0 0.0
    %374 = vmatpush.xpose.msra.mxu0 0.0
    %375 = vmatpush.xpose.msra.mxu0 0.0
    %376 = vmatpush.xpose.msra.mxu0 0.0
    %377 = vmatpush.xpose.msra.mxu0 0.0
    %378 = vmatpush.xpose.msra.mxu0 0.0
    %379 = vmatpush.xpose.msra.mxu0 0.0
    %380 = vmatpush.xpose.msra.mxu0 0.0
    %381 = vmatpush.xpose.msra.mxu0 0.0
    %382 = vmatpush.xpose.msra.mxu0 0.0
    %383 = vmatpush.xpose.msra.mxu0 0.0
    %384 = vmatpush.xpose.msra.mxu0 0.0
    %385 = vmatpush.xpose.msra.mxu0 0.0
    %386 = vmatpush.xpose.msra.mxu0 0.0
    %387 = vmatpush.xpose.msra.mxu0 0.0
    %388 = vmatpush.xpose.msra.mxu0 %v371
    %389 = vmatmul.f32.gmra.mxu0 %v369
    %v390 = vpop.f32.mrf.mxu0
    %v391 = vadd.f32 0.0, %v390
    %392 = vdwg.mxu0
    %v393 = vlaneseq
    %v394 = vshrl.u32 %v393, 7
    %v395 = vlaneseq
    %v396 = vand.u32 %v395, 127
    %vm397 = vcmp.le.s32.totalorder %v396, %v394
    %v398 = vsel %vm397, 1, 0
    %vm399 = vcmp.eq.s32.totalorder %v398, 1
    %v400 = vsel %vm399, %v202, -1e+30
    %v401 = vsel %vm399, %v229, -1e+30
    %v402 = vsel %vm399, %v256, -1e+30
    %v403 = vsel %vm399, %v283, -1e+30
    %v404 = vsel %vm399, %v310, -1e+30
    %v405 = vsel %vm399, %v337, -1e+30
    %v406 = vsel %vm399, %v364, -1e+30
    %v407 = vsel %vm399, %v391, -1e+30
    %v408 = vsel %vm178, %v400, -inf
    %409 = vmax.xlane.f32.xlu0 %v408
    %v410 = vpop.xlane.xlu0 %409
    %v411 = vsel %vm178, %v401, -inf
    %412 = vmax.xlane.f32.xlu0 %v411
    %v413 = vpop.xlane.xlu0 %412
    %v414 = vsel %vm178, %v402, -inf
    %415 = vmax.xlane.f32.xlu0 %v414
    %v416 = vpop.xlane.xlu0 %415
    %v417 = vsel %vm178, %v403, -inf
    %418 = vmax.xlane.f32.xlu0 %v417
    %v419 = vpop.xlane.xlu0 %418
    %v420 = vsel %vm178, %v404, -inf
    %421 = vmax.xlane.f32.xlu0 %v420
    %v422 = vpop.xlane.xlu0 %421
    %v423 = vsel %vm178, %v405, -inf
    %424 = vmax.xlane.f32.xlu0 %v423
    %v425 = vpop.xlane.xlu0 %424
    %v426 = vsel %vm178, %v406, -inf
    %427 = vmax.xlane.f32.xlu0 %v426
    %v428 = vpop.xlane.xlu0 %427
    %v429 = vsel %vm178, %v407, -inf
    %430 = vmax.xlane.f32.xlu0 %v429
    %v431 = vpop.xlane.xlu0 %430
    %v432 = vsub.f32 %v400, %v410
    %v433 = vsub.f32 %v401, %v413
    %v434 = vsub.f32 %v402, %v416
    %v435 = vsub.f32 %v403, %v419
    %v436 = vsub.f32 %v404, %v422
    %v437 = vsub.f32 %v405, %v425
    %v438 = vsub.f32 %v406, %v428
    %v439 = vsub.f32 %v407, %v431
    %v440 = vmul.f32 %v432, 1.442695
    %v441 = vpow.pop %v440
    %v442 = vmul.f32 %v433, 1.442695
    %v443 = vpow.pop %v442
    %v444 = vmul.f32 %v434, 1.442695
    %v445 = vpow.pop %v444
    %v446 = vmul.f32 %v435, 1.442695
    %v447 = vpow.pop %v446
    %v448 = vmul.f32 %v436, 1.442695
    %v449 = vpow.pop %v448
    %v450 = vmul.f32 %v437, 1.442695
    %v451 = vpow.pop %v450
    %v452 = vmul.f32 %v438, 1.442695
    %v453 = vpow.pop %v452
    %v454 = vmul.f32 %v439, 1.442695
    %v455 = vpow.pop %v454
    %v456 = vsel %vm178, %v441, 0.0
    %457 = vadd.xlane.f32.xlu0 %v456
    %v458 = vpop.xlane.xlu0 %457
    %v459 = vsel %vm178, %v443, 0.0
    %460 = vadd.xlane.f32.xlu0 %v459
    %v461 = vpop.xlane.xlu0 %460
    %v462 = vsel %vm178, %v445, 0.0
    %463 = vadd.xlane.f32.xlu0 %v462
    %v464 = vpop.xlane.xlu0 %463
    %v465 = vsel %vm178, %v447, 0.0
    %466 = vadd.xlane.f32.xlu0 %v465
    %v467 = vpop.xlane.xlu0 %466
    %v468 = vsel %vm178, %v449, 0.0
    %469 = vadd.xlane.f32.xlu0 %v468
    %v470 = vpop.xlane.xlu0 %469
    %v471 = vsel %vm178, %v451, 0.0
    %472 = vadd.xlane.f32.xlu0 %v471
    %v473 = vpop.xlane.xlu0 %472
    %v474 = vsel %vm178, %v453, 0.0
    %475 = vadd.xlane.f32.xlu0 %v474
    %v476 = vpop.xlane.xlu0 %475
    %v477 = vsel %vm178, %v455, 0.0
    %478 = vadd.xlane.f32.xlu0 %v477
    %v479 = vpop.xlane.xlu0 %478
    %v480 = vrcp.pop %v458
    %v481 = vrcp.pop %v461
    %v482 = vrcp.pop %v464
    %v483 = vrcp.pop %v467
    %v484 = vrcp.pop %v470
    %v485 = vrcp.pop %v473
    %v486 = vrcp.pop %v476
    %v487 = vrcp.pop %v479
    %v488 = vmul.f32 %v441, %v480
    %v489 = vmul.f32 %v443, %v481
    %v490 = vmul.f32 %v445, %v482
    %v491 = vmul.f32 %v447, %v483
    %v492 = vmul.f32 %v449, %v484
    %v493 = vmul.f32 %v451, %v485
    %v494 = vmul.f32 %v453, %v486
    %v495 = vmul.f32 %v455, %v487
    %496 = vrot.lane.b32.xlu0 %v143, 64
    %v497 = vpop.permute.xlu0 %496
    %v500 = vsel %vm178, %v488, 0
    %502 = vmatpush.msra.mxu0 0.0
    %503 = vmatpush.msra.mxu0 0.0
    %504 = vmatpush.msra.mxu0 0.0
    %505 = vmatpush.msra.mxu0 0.0
    %506 = vmatpush.msra.mxu0 0.0
    %507 = vmatpush.msra.mxu0 0.0
    %508 = vmatpush.msra.mxu0 0.0
    %509 = vmatpush.msra.mxu0 0.0
    %510 = vmatpush.msra.mxu0 0.0
    %511 = vmatpush.msra.mxu0 0.0
    %512 = vmatpush.msra.mxu0 0.0
    %513 = vmatpush.msra.mxu0 0.0
    %514 = vmatpush.msra.mxu0 0.0
    %515 = vmatpush.msra.mxu0 0.0
    %516 = vmatpush.msra.mxu0 0.0
    %517 = vmatpush.msra.mxu0 %v497
    %518 = vmatmul.f32.gmra.mxu0 %v500
    %v519 = vpop.f32.mrf.mxu0
    %v520 = vadd.f32 0.0, %v519
    %521 = vdwg.mxu0
    %522 = vrot.lane.b32.xlu0 %v146, 64
    %v523 = vpop.permute.xlu0 %522
    %v526 = vsel %vm178, %v489, 0
    %528 = vmatpush.msra.mxu0 0.0
    %529 = vmatpush.msra.mxu0 0.0
    %530 = vmatpush.msra.mxu0 0.0
    %531 = vmatpush.msra.mxu0 0.0
    %532 = vmatpush.msra.mxu0 0.0
    %533 = vmatpush.msra.mxu0 0.0
    %534 = vmatpush.msra.mxu0 0.0
    %535 = vmatpush.msra.mxu0 0.0
    %536 = vmatpush.msra.mxu0 0.0
    %537 = vmatpush.msra.mxu0 0.0
    %538 = vmatpush.msra.mxu0 0.0
    %539 = vmatpush.msra.mxu0 0.0
    %540 = vmatpush.msra.mxu0 0.0
    %541 = vmatpush.msra.mxu0 0.0
    %542 = vmatpush.msra.mxu0 0.0
    %543 = vmatpush.msra.mxu0 %v523
    %544 = vmatmul.f32.gmra.mxu0 %v526
    %v545 = vpop.f32.mrf.mxu0
    %v546 = vadd.f32 0.0, %v545
    %547 = vdwg.mxu0
    %548 = vrot.lane.b32.xlu0 %v150, 64
    %v549 = vpop.permute.xlu0 %548
    %v552 = vsel %vm178, %v490, 0
    %554 = vmatpush.msra.mxu0 0.0
    %555 = vmatpush.msra.mxu0 0.0
    %556 = vmatpush.msra.mxu0 0.0
    %557 = vmatpush.msra.mxu0 0.0
    %558 = vmatpush.msra.mxu0 0.0
    %559 = vmatpush.msra.mxu0 0.0
    %560 = vmatpush.msra.mxu0 0.0
    %561 = vmatpush.msra.mxu0 0.0
    %562 = vmatpush.msra.mxu0 0.0
    %563 = vmatpush.msra.mxu0 0.0
    %564 = vmatpush.msra.mxu0 0.0
    %565 = vmatpush.msra.mxu0 0.0
    %566 = vmatpush.msra.mxu0 0.0
    %567 = vmatpush.msra.mxu0 0.0
    %568 = vmatpush.msra.mxu0 0.0
    %569 = vmatpush.msra.mxu0 %v549
    %570 = vmatmul.f32.gmra.mxu0 %v552
    %v571 = vpop.f32.mrf.mxu0
    %v572 = vadd.f32 0.0, %v571
    %573 = vdwg.mxu0
    %574 = vrot.lane.b32.xlu0 %v154, 64
    %v575 = vpop.permute.xlu0 %574
    %v578 = vsel %vm178, %v491, 0
    %580 = vmatpush.msra.mxu0 0.0
    %581 = vmatpush.msra.mxu0 0.0
    %582 = vmatpush.msra.mxu0 0.0
    %583 = vmatpush.msra.mxu0 0.0
    %584 = vmatpush.msra.mxu0 0.0
    %585 = vmatpush.msra.mxu0 0.0
    %586 = vmatpush.msra.mxu0 0.0
    %587 = vmatpush.msra.mxu0 0.0
    %588 = vmatpush.msra.mxu0 0.0
    %589 = vmatpush.msra.mxu0 0.0
    %590 = vmatpush.msra.mxu0 0.0
    %591 = vmatpush.msra.mxu0 0.0
    %592 = vmatpush.msra.mxu0 0.0
    %593 = vmatpush.msra.mxu0 0.0
    %594 = vmatpush.msra.mxu0 0.0
    %595 = vmatpush.msra.mxu0 %v575
    %596 = vmatmul.f32.gmra.mxu0 %v578
    %v597 = vpop.f32.mrf.mxu0
    %v598 = vadd.f32 0.0, %v597
    %599 = vdwg.mxu0
    %600 = vrot.lane.b32.xlu0 %v157, 64
    %v601 = vpop.permute.xlu0 %600
    %v604 = vsel %vm178, %v492, 0
    %606 = vmatpush.msra.mxu0 0.0
    %607 = vmatpush.msra.mxu0 0.0
    %608 = vmatpush.msra.mxu0 0.0
    %609 = vmatpush.msra.mxu0 0.0
    %610 = vmatpush.msra.mxu0 0.0
    %611 = vmatpush.msra.mxu0 0.0
    %612 = vmatpush.msra.mxu0 0.0
    %613 = vmatpush.msra.mxu0 0.0
    %614 = vmatpush.msra.mxu0 0.0
    %615 = vmatpush.msra.mxu0 0.0
    %616 = vmatpush.msra.mxu0 0.0
    %617 = vmatpush.msra.mxu0 0.0
    %618 = vmatpush.msra.mxu0 0.0
    %619 = vmatpush.msra.mxu0 0.0
    %620 = vmatpush.msra.mxu0 0.0
    %621 = vmatpush.msra.mxu0 %v601
    %622 = vmatmul.f32.gmra.mxu0 %v604
    %v623 = vpop.f32.mrf.mxu0
    %v624 = vadd.f32 0.0, %v623
    %625 = vdwg.mxu0
    %626 = vrot.lane.b32.xlu0 %v160, 64
    %v627 = vpop.permute.xlu0 %626
    %v630 = vsel %vm178, %v493, 0
    %632 = vmatpush.msra.mxu0 0.0
    %633 = vmatpush.msra.mxu0 0.0
    %634 = vmatpush.msra.mxu0 0.0
    %635 = vmatpush.msra.mxu0 0.0
    %636 = vmatpush.msra.mxu0 0.0
    %637 = vmatpush.msra.mxu0 0.0
    %638 = vmatpush.msra.mxu0 0.0
    %639 = vmatpush.msra.mxu0 0.0
    %640 = vmatpush.msra.mxu0 0.0
    %641 = vmatpush.msra.mxu0 0.0
    %642 = vmatpush.msra.mxu0 0.0
    %643 = vmatpush.msra.mxu0 0.0
    %644 = vmatpush.msra.mxu0 0.0
    %645 = vmatpush.msra.mxu0 0.0
    %646 = vmatpush.msra.mxu0 0.0
    %647 = vmatpush.msra.mxu0 %v627
    %648 = vmatmul.f32.gmra.mxu0 %v630
    %v649 = vpop.f32.mrf.mxu0
    %v650 = vadd.f32 0.0, %v649
    %651 = vdwg.mxu0
    %652 = vrot.lane.b32.xlu0 %v163, 64
    %v653 = vpop.permute.xlu0 %652
    %v656 = vsel %vm178, %v494, 0
    %658 = vmatpush.msra.mxu0 0.0
    %659 = vmatpush.msra.mxu0 0.0
    %660 = vmatpush.msra.mxu0 0.0
    %661 = vmatpush.msra.mxu0 0.0
    %662 = vmatpush.msra.mxu0 0.0
    %663 = vmatpush.msra.mxu0 0.0
    %664 = vmatpush.msra.mxu0 0.0
    %665 = vmatpush.msra.mxu0 0.0
    %666 = vmatpush.msra.mxu0 0.0
    %667 = vmatpush.msra.mxu0 0.0
    %668 = vmatpush.msra.mxu0 0.0
    %669 = vmatpush.msra.mxu0 0.0
    %670 = vmatpush.msra.mxu0 0.0
    %671 = vmatpush.msra.mxu0 0.0
    %672 = vmatpush.msra.mxu0 0.0
    %673 = vmatpush.msra.mxu0 %v653
    %674 = vmatmul.f32.gmra.mxu0 %v656
    %v675 = vpop.f32.mrf.mxu0
    %v676 = vadd.f32 0.0, %v675
    %677 = vdwg.mxu0
    %678 = vrot.lane.b32.xlu0 %v166, 64
    %v679 = vpop.permute.xlu0 %678
    %v682 = vsel %vm178, %v495, 0
    %684 = vmatpush.msra.mxu0 0.0
    %685 = vmatpush.msra.mxu0 0.0
    %686 = vmatpush.msra.mxu0 0.0
    %687 = vmatpush.msra.mxu0 0.0
    %688 = vmatpush.msra.mxu0 0.0
    %689 = vmatpush.msra.mxu0 0.0
    %690 = vmatpush.msra.mxu0 0.0
    %691 = vmatpush.msra.mxu0 0.0
    %692 = vmatpush.msra.mxu0 0.0
    %693 = vmatpush.msra.mxu0 0.0
    %694 = vmatpush.msra.mxu0 0.0
    %695 = vmatpush.msra.mxu0 0.0
    %696 = vmatpush.msra.mxu0 0.0
    %697 = vmatpush.msra.mxu0 0.0
    %698 = vmatpush.msra.mxu0 0.0
    %699 = vmatpush.msra.mxu0 %v679
    %700 = vmatmul.f32.gmra.mxu0 %v682
    %v701 = vpop.f32.mrf.mxu0
    %v702 = vadd.f32 0.0, %v701
    %703 = vdwg.mxu0
    %v704 = vld [vmem:[%s5] sm:$0xff]
    %v705 = vld [vmem:[%s5 + $0x8] sm:$0xff]
    %v707 = vsel %vm178, %v572, 0
    %v710 = vsel %vm178, %v598, 0
    %712 = vmatpush.msra.mxu0 0.0
    %713 = vmatpush.msra.mxu0 0.0
    %714 = vmatpush.msra.mxu0 0.0
    %715 = vmatpush.msra.mxu0 0.0
    %716 = vmatpush.msra.mxu0 0.0
    %717 = vmatpush.msra.mxu0 0.0
    %718 = vmatpush.msra.mxu0 0.0
    %719 = vmatpush.msra.mxu0 0.0
    %720 = vmatpush.msra.mxu0 0.0
    %721 = vmatpush.msra.mxu0 0.0
    %722 = vmatpush.msra.mxu0 0.0
    %723 = vmatpush.msra.mxu0 0.0
    %724 = vmatpush.msra.mxu0 0.0
    %725 = vmatpush.msra.mxu0 0.0
    %726 = vmatpush.msra.mxu0 0.0
    %727 = vmatpush.msra.mxu0 %v705
    %728 = vmatmul.f32.gmra.mxu0 %v707
    %v729 = vpop.f32.mrf.mxu0
    %v730 = vadd.f32 0.0, %v729
    %731 = vmatmul.f32.gmra.mxu0 %v710
    %v732 = vpop.f32.mrf.mxu0
    %v733 = vadd.f32 0.0, %v732
    %734 = vdwg.mxu0
    %v736 = vsel %vm178, %v520, 0
    %v739 = vsel %vm178, %v546, 0
    %741 = vmatpush.msra.mxu0 0.0
    %742 = vmatpush.msra.mxu0 0.0
    %743 = vmatpush.msra.mxu0 0.0
    %744 = vmatpush.msra.mxu0 0.0
    %745 = vmatpush.msra.mxu0 0.0
    %746 = vmatpush.msra.mxu0 0.0
    %747 = vmatpush.msra.mxu0 0.0
    %748 = vmatpush.msra.mxu0 0.0
    %749 = vmatpush.msra.mxu0 0.0
    %750 = vmatpush.msra.mxu0 0.0
    %751 = vmatpush.msra.mxu0 0.0
    %752 = vmatpush.msra.mxu0 0.0
    %753 = vmatpush.msra.mxu0 0.0
    %754 = vmatpush.msra.mxu0 0.0
    %755 = vmatpush.msra.mxu0 0.0
    %756 = vmatpush.msra.mxu0 %v704
    %757 = vmatmul.f32.gmra.mxu0 %v736
    %v758 = vpop.f32.mrf.mxu0
    %v759 = vadd.f32 %v730, %v758
    %760 = vmatmul.f32.gmra.mxu0 %v739
    %v761 = vpop.f32.mrf.mxu0
    %v762 = vadd.f32 %v733, %v761
    %763 = vdwg.mxu0
    %v764 = vld [vmem:[%s5 + $0x10] sm:$0xff]
    %v766 = vsel %vm178, %v624, 0
    %v769 = vsel %vm178, %v650, 0
    %771 = vmatpush.msra.mxu0 0.0
    %772 = vmatpush.msra.mxu0 0.0
    %773 = vmatpush.msra.mxu0 0.0
    %774 = vmatpush.msra.mxu0 0.0
    %775 = vmatpush.msra.mxu0 0.0
    %776 = vmatpush.msra.mxu0 0.0
    %777 = vmatpush.msra.mxu0 0.0
    %778 = vmatpush.msra.mxu0 0.0
    %779 = vmatpush.msra.mxu0 0.0
    %780 = vmatpush.msra.mxu0 0.0
    %781 = vmatpush.msra.mxu0 0.0
    %782 = vmatpush.msra.mxu0 0.0
    %783 = vmatpush.msra.mxu0 0.0
    %784 = vmatpush.msra.mxu0 0.0
    %785 = vmatpush.msra.mxu0 0.0
    %786 = vmatpush.msra.mxu0 %v764
    %787 = vmatmul.f32.gmra.mxu0 %v766
    %v788 = vpop.f32.mrf.mxu0
    %v789 = vadd.f32 0.0, %v788
    %790 = vmatmul.f32.gmra.mxu0 %v769
    %v791 = vpop.f32.mrf.mxu0
    %v792 = vadd.f32 0.0, %v791
    %793 = vdwg.mxu0
    %v794 = vadd.f32 %v759, %v789
    %v795 = vadd.f32 %v762, %v792
    %v796 = vld [vmem:[%s5 + $0x18] sm:$0xff]
    %v798 = vsel %vm178, %v676, 0
    %v801 = vsel %vm178, %v702, 0
    %803 = vmatpush.msra.mxu0 0.0
    %804 = vmatpush.msra.mxu0 0.0
    %805 = vmatpush.msra.mxu0 0.0
    %806 = vmatpush.msra.mxu0 0.0
    %807 = vmatpush.msra.mxu0 0.0
    %808 = vmatpush.msra.mxu0 0.0
    %809 = vmatpush.msra.mxu0 0.0
    %810 = vmatpush.msra.mxu0 0.0
    %811 = vmatpush.msra.mxu0 0.0
    %812 = vmatpush.msra.mxu0 0.0
    %813 = vmatpush.msra.mxu0 0.0
    %814 = vmatpush.msra.mxu0 0.0
    %815 = vmatpush.msra.mxu0 0.0
    %816 = vmatpush.msra.mxu0 0.0
    %817 = vmatpush.msra.mxu0 0.0
    %818 = vmatpush.msra.mxu0 %v796
    %819 = vmatmul.f32.gmra.mxu0 %v798
    %v820 = vpop.f32.mrf.mxu0
    %v821 = vadd.f32 0.0, %v820
    %822 = vmatmul.f32.gmra.mxu0 %v801
    %v823 = vpop.f32.mrf.mxu0
    %v824 = vadd.f32 0.0, %v823
    %825 = vdwg.mxu0
    %v826 = vadd.f32 %v794, %v821
    %v827 = vadd.f32 %v795, %v824
    %v828 = vadd.f32 %v45, %v826
    %v829 = vadd.f32 %v46, %v827
    %v830 = vld [vmem:[%s6] sm:$0x1]
    %v832 = vperm.slane %v830, 0
    %v834 = vadd.f32 %v828, %v832
    %v835 = vadd.f32 %v829, %v832
    %v836 = vld [vmem:[%s7] sm:$0x1]
    %v837 = vld [vmem:[%s8] sm:$0x1]
    %v838 = vsel %vm49, %v834, 0.0
    %839 = vadd.xlane.f32.xlu0 %v838
    %v840 = vpop.xlane.xlu0 %839
    %v841 = vsel %vm49, %v835, 0.0
    %842 = vadd.xlane.f32.xlu0 %v841
    %v843 = vpop.xlane.xlu0 %842
    %v844 = vmul.f32 %v840, %v62
    %v845 = vmul.f32 %v843, %v62
    %v846 = vsub.f32 %v834, %v844
    %v847 = vsub.f32 %v835, %v845
    %v848 = vmul.f32 %v846, %v846
    %v849 = vmul.f32 %v847, %v847
    %v850 = vsel %vm49, %v848, 0.0
    %851 = vadd.xlane.f32.xlu0 %v850
    %v852 = vpop.xlane.xlu0 %851
    %v853 = vsel %vm49, %v849, 0.0
    %854 = vadd.xlane.f32.xlu0 %v853
    %v855 = vpop.xlane.xlu0 %854
    %v856 = vmul.f32 %v852, %v62
    %v857 = vmul.f32 %v855, %v62
    %v858 = vadd.f32 %v856, 1e-05
    %v859 = vadd.f32 %v857, 1e-05
    %v860 = vrsqrt.pop %v858
    %v861 = vmul.f32 %v860, %v858
    %v862 = vmul.f32 %v861, %v860
    %v863 = vmul.f32 0.5, %v862
    %v864 = vsub.f32 1.5, %v863
    %v865 = vmul.f32 %v860, %v864
    %vm866 = vweird.f32 %v858
    %vm867 = vweird.f32 %v860
    %vm868 = vmor %vm866, %vm867
    %v869 = vsel %vm868, %v860, %v865
    %v870 = vrsqrt.pop %v859
    %v871 = vmul.f32 %v870, %v859
    %v872 = vmul.f32 %v871, %v870
    %v873 = vmul.f32 0.5, %v872
    %v874 = vsub.f32 1.5, %v873
    %v875 = vmul.f32 %v870, %v874
    %vm876 = vweird.f32 %v859
    %vm877 = vweird.f32 %v870
    %vm878 = vmor %vm876, %vm877
    %v879 = vsel %vm878, %v870, %v875
    %v880 = vmul.f32 %v846, %v869
    %v881 = vmul.f32 %v847, %v879
    %v883 = vperm.slane %v836, 0
    %v885 = vmul.f32 %v880, %v883
    %v886 = vmul.f32 %v881, %v883
    %v888 = vperm.slane %v837, 0
    %v890 = vadd.f32 %v885, %v888
    %v891 = vadd.f32 %v886, %v888
    %v892 = vld [vmem:[%s9] sm:$0xff]
    %v893 = vld [vmem:[%s9 + $0x8] sm:$0xff]
    %v894 = vld [vmem:[%s9 + $0x10] sm:$0xff]
    %v895 = vld [vmem:[%s9 + $0x18] sm:$0xff]
    %v896 = vld [vmem:[%s10] sm:$0x1]
    %v898 = vperm.slane %v896, 0
    %v901 = vsel %vm49, %v890, 0
    %v904 = vsel %vm49, %v891, 0
    %906 = vmatpush.msra.mxu0 0.0
    %907 = vmatpush.msra.mxu0 0.0
    %908 = vmatpush.msra.mxu0 0.0
    %909 = vmatpush.msra.mxu0 0.0
    %910 = vmatpush.msra.mxu0 0.0
    %911 = vmatpush.msra.mxu0 0.0
    %912 = vmatpush.msra.mxu0 0.0
    %913 = vmatpush.msra.mxu0 0.0
    %914 = vmatpush.msra.mxu0 0.0
    %915 = vmatpush.msra.mxu0 0.0
    %916 = vmatpush.msra.mxu0 0.0
    %917 = vmatpush.msra.mxu0 0.0
    %918 = vmatpush.msra.mxu0 %v895
    %919 = vmatpush.msra.mxu0 %v894
    %920 = vmatpush.msra.mxu0 %v893
    %921 = vmatpush.msra.mxu0 %v892
    %922 = vmatmul.f32.gmra.mxu0 %v901
    %v923 = vpop.f32.mrf.mxu0
    %v924 = vadd.f32 %v898, %v923
    %925 = vmatmul.f32.gmra.mxu0 %v904
    %v926 = vpop.f32.mrf.mxu0
    %v927 = vadd.f32 %v898, %v926
    %928 = vdwg.mxu0
    %v929 = vmul.f32 %v924, 0.5
    %v930 = vmul.f32 %v927, 0.5
    %v931 = vmul.f32 %v924, %v924
    %v932 = vmul.f32 %v927, %v927
    %v933 = vmul.f32 %v924, %v931
    %v934 = vmul.f32 %v927, %v932
    %v935 = vmul.f32 %v933, 0.044715
    %v936 = vmul.f32 %v934, 0.044715
    %v937 = vadd.f32 %v924, %v935
    %v938 = vadd.f32 %v927, %v936
    %v939 = vmul.f32 %v937, 0.7978845
    %v940 = vmul.f32 %v938, 0.7978845
    %v941 = vtanh.pop %v939
    %v942 = vtanh.pop %v940
    %v943 = vadd.f32 %v941, 1.0
    %v944 = vadd.f32 %v942, 1.0
    %v945 = vmul.f32 %v929, %v943
    %v946 = vmul.f32 %v930, %v944
    %v947 = vld [vmem:[%s11] sm:$0xff]
    %v948 = vld [vmem:[%s11 + $0x8] sm:$0xff]
    %v949 = vld [vmem:[%s11 + $0x10] sm:$0xff]
    %v950 = vld [vmem:[%s11 + $0x18] sm:$0xff]
    %v951 = vld [vmem:[%s11 + $0x20] sm:$0xff]
    %v952 = vld [vmem:[%s11 + $0x28] sm:$0xff]
    %v953 = vld [vmem:[%s11 + $0x30] sm:$0xff]
    %v954 = vld [vmem:[%s11 + $0x38] sm:$0xff]
    %v955 = vld [vmem:[%s11 + $0x40] sm:$0xff]
    %v956 = vld [vmem:[%s11 + $0x48] sm:$0xff]
    %v957 = vld [vmem:[%s11 + $0x50] sm:$0xff]
    %v958 = vld [vmem:[%s11 + $0x58] sm:$0xff]
    %v959 = vld [vmem:[%s11 + $0x60] sm:$0xff]
    %v960 = vld [vmem:[%s11 + $0x68] sm:$0xff]
    %v961 = vld [vmem:[%s11 + $0x70] sm:$0xff]
    %v962 = vld [vmem:[%s11 + $0x78] sm:$0xff]
    %v963 = vld [vmem:[%s12] sm:$0x1]
    %v965 = vperm.slane %v963, 0
    %967 = vmatpush.msra.mxu0 %v962
    %968 = vmatpush.msra.mxu0 %v961
    %969 = vmatpush.msra.mxu0 %v960
    %970 = vmatpush.msra.mxu0 %v959
    %971 = vmatpush.msra.mxu0 %v958
    %972 = vmatpush.msra.mxu0 %v957
    %973 = vmatpush.msra.mxu0 %v956
    %974 = vmatpush.msra.mxu0 %v955
    %975 = vmatpush.msra.mxu0 %v954
    %976 = vmatpush.msra.mxu0 %v953
    %977 = vmatpush.msra.mxu0 %v952
    %978 = vmatpush.msra.mxu0 %v951
    %979 = vmatpush.msra.mxu0 %v950
    %980 = vmatpush.msra.mxu0 %v949
    %981 = vmatpush.msra.mxu0 %v948
    %982 = vmatpush.msra.mxu0 %v947
    %983 = vmatmul.f32.gmra.mxu0 %v945
    %v984 = vpop.f32.mrf.mxu0
    %v985 = vadd.f32 %v965, %v984
    %986 = vmatmul.f32.gmra.mxu0 %v946
    %v987 = vpop.f32.mrf.mxu0
    %v988 = vadd.f32 %v965, %v987
    %989 = vdwg.mxu0
    %v990 = vadd.f32 %v834, %v985
    %v991 = vadd.f32 %v835, %v988
    %992 = vst.msk [vmem:[#allocation2] sm:$0xff] %vm49, %v990
    %993 = vst.msk [vmem:[#allocation2 + $0x8] sm:$0xff] %vm49, %v991
    // Predicated region
    $region54: #{tpu_custom_call.1} parent=1 // pred_check
      _
    $region55: #{tpu_custom_call.1} parent=1 // pred_check_branch
      %995 = sbr.rel (0) target = $region57
    $region56: #{tpu_custom_call.1} parent=1 // pred_region
      %997 = vsyncadd [#allocation3], 0
      %s998 = sshll.u32 [#allocation2], 4
      %s999 = int_to_ptr.vmem [resolvable:$true] %s998
      %s1000 = sshll.u32 %s13, 4
      %s1001 = int_to_ptr.hbm [resolvable:$true] %s1000
      %1006 = dma.vmem_to_hbm [thread:$0]  %s999, 256, %s1001, [#allocation3], 128, 128, 8
    $region57: #{tpu_custom_call.1} parent=1 // pred_fallthru
      _
    // Predicated region
    $region58: #{tpu_custom_call.1} parent=1 // pred_check
      _
    $region59: #{tpu_custom_call.1} parent=1 // pred_check_branch
      %1008 = sbr.rel (0) target = $region61
    $region60: #{tpu_custom_call.1} parent=1 // pred_region
      %1010 = dma.done [#allocation3], 256
    $region61: #{tpu_custom_call.1} parent=1 // pred_fallthru
      _
    %1011 = vsyncpa [#allocation3], 1

</llo_original>
